<compile_context>
chip_gen: v5e
topology: v5e:2x2
jax: 0.10.0
libtpu: 0.0.40
codegen_flags: <defaults>
</compile_context>

<pallas_src>
import functools

import jax
import jax.numpy as jnp
from jax.experimental import pallas as pl
from jax.experimental.pallas import tpu as pltpu


def _round_up(n, m):
    return ((n + m - 1) // m) * m


def _pad2d(a, rows, cols):
    pr, pc = rows - a.shape[0], cols - a.shape[1]
    if pr or pc:
        a = jnp.pad(a, ((0, pr), (0, pc)))
    return a


def _tpu_kind():
    try:
        return jax.devices()[0].device_kind.lower()
    except Exception:
        return ""


def _mlp_kernel(x_ref, w1_ref, b1_ref, w2_ref, b2_ref, w3_ref, b3_ref, o_ref,
                *, negative_slope, act_dtype):
    """Fused Linear->LeakyReLU->Linear->LeakyReLU->Linear, one batch tile/step.

    x arrives f32 (cast to bf16 here, saving a wrapper HBM pass); weights are
    pre-packed bf16; matmuls accumulate in f32; bias adds are f32; the
    LeakyReLU / inter-layer activations live in `act_dtype` (bf16 on v6e/v7x,
    f32 on v5e). Dropout (eval mode) == identity.
    """
    x = x_ref[...].astype(jnp.bfloat16)                                # (tb, Din)

    h = jnp.dot(x, w1_ref[...], preferred_element_type=jnp.float32)   # (tb, H1p) f32
    h = h + b1_ref[...]
    h = h.astype(act_dtype)
    h = jnp.where(h >= 0, h, h * negative_slope)                       # LeakyReLU

    h = jnp.dot(h.astype(jnp.bfloat16), w2_ref[...],
                preferred_element_type=jnp.float32)                    # (tb, H2p) f32
    h = h + b2_ref[...]
    h = h.astype(act_dtype)
    h = jnp.where(h >= 0, h, h * negative_slope)                       # LeakyReLU

    out = jnp.dot(h.astype(jnp.bfloat16), w3_ref[...],
                  preferred_element_type=jnp.float32)                  # (tb, Dout) f32
    out = out + b3_ref[...]
    o_ref[...] = out.astype(o_ref.dtype)


def pack_params(params, compute_dtype=jnp.bfloat16):
    """One-time packing: hidden dims padded to x128 (lane-dense), weights cast
    to bf16, biases kept f32. Input feature dim and output dim stay UNPADDED
    (block dim == array dim is legal, avoids wasted DMA / writeback).
    Zero-padding is exact: padded lanes get 0 bias, LeakyReLU(0)=0, and the
    matching downstream weight rows are zero."""
    w1, b1, w2, b2, w3, b3 = params
    d_in, h1 = w1.shape
    h2, d_out = w2.shape[1], w3.shape[1]
    h1_p, h2_p = _round_up(h1, 128), _round_up(h2, 128)

    w1_p = _pad2d(w1, d_in, h1_p).astype(compute_dtype)
    w2_p = _pad2d(w2, h1_p, h2_p).astype(compute_dtype)
    w3_p = _pad2d(w3, h2_p, d_out).astype(compute_dtype)
    b1_p = _pad2d(b1.reshape(1, -1), 1, h1_p).astype(jnp.float32)
    b2_p = _pad2d(b2.reshape(1, -1), 1, h2_p).astype(jnp.float32)
    b3_p = b3.reshape(1, -1).astype(jnp.float32)
    return (w1_p, b1_p, w2_p, b2_p, w3_p, b3_p)


def mlp_bert_forward(x, packed_params, *, negative_slope=0.01, batch_tile=None):
    """x: [B, input_size] float32, packed_params from pack_params().
    Returns f32 logits [B, output_size]."""
    w1_p, b1_p, w2_p, b2_p, w3_p, b3_p = packed_params
    B, d_in = x.shape
    assert w1_p.shape[0] == d_in
    h1_p, h2_p = w1_p.shape[1], w2_p.shape[1]
    d_out = w3_p.shape[1]

    kind = _tpu_kind()
    is_v7x = "v7" in kind
    is_v5 = "v5" in kind
    act_dtype = jnp.float32 if is_v5 else jnp.bfloat16     # v5e VPU has no bf16 VALU
    vmem_limit = (48 if is_v7x else 96) * 1024 * 1024      # v7x: 64 MiB physical
    tile_cap = 512 if is_v7x else 1024                     # v5e/v6e: 128 MiB VMEM

    # Batch tiling: target >= 2 grid steps so the "parallel" batch axis can
    # shard across v7x's 2 TensorCores (near-free on v5e/v6e at these sizes).
    if batch_tile is None:
        if B > 8:
            batch_tile = min(_round_up(-(-B // 2), 8), tile_cap)
        else:
            batch_tile = _round_up(max(B, 1), 8)
    batch_tile = _round_up(batch_tile, 8)
    B_p = _round_up(B, batch_tile)
    grid = (B_p // batch_tile,)

    # Only batch padding (if any); x stays f32 and feature-unpadded.
    x_p = x if B_p == B else jnp.pad(x, ((0, B_p - B), (0, 0)))

    kernel = functools.partial(_mlp_kernel, negative_slope=negative_slope,
                               act_dtype=act_dtype)

    def run(weight_pipeline_mode):
        wkw = {} if weight_pipeline_mode is None else {
            "pipeline_mode": weight_pipeline_mode}

        def wspec(shape):
            # Grid-invariant (resident) block: constant index_map.
            return pl.BlockSpec(shape, lambda i: (0, 0), **wkw)

        return pl.pallas_call(
            kernel,
            out_shape=jax.ShapeDtypeStruct((B_p, d_out), jnp.float32),
            grid_spec=pltpu.PrefetchScalarGridSpec(
                num_scalar_prefetch=0,
                grid=grid,
                in_specs=[
                    # x: tile the batch axis; last dim == full array dim (no pad).
                    pl.BlockSpec((batch_tile, d_in), lambda i: (i, 0)),
                    wspec((d_in, h1_p)),
                    wspec((1, h1_p)),
                    wspec((h1_p, h2_p)),
                    wspec((1, h2_p)),
                    wspec((h2_p, d_out)),
                    wspec((1, d_out)),
                ],
                # Output keeps the true d_out (block dim == array dim).
                out_specs=pl.BlockSpec((batch_tile, d_out), lambda i: (i, 0)),
            ),
            compiler_params=pltpu.CompilerParams(
                dimension_semantics=("parallel",),
                vmem_limit_bytes=vmem_limit,
            ),
        )(x_p, w1_p, b1_p, w2_p, b2_p, w3_p, b3_p)

    buffered = getattr(pl, "Buffered", None)
    if buffered is not None:
        try:
            # Single-buffer the grid-invariant weights (no point double-
            # buffering a constant-index block; halves their VMEM footprint).
            out_p = run(buffered(1))
        except Exception:
            out_p = run(None)
    else:
        out_p = run(None)

    return out_p if B_p == B else out_p[:B]


def init_params(key, input_size, hidden_sizes, output_size, negative_slope):
    """Kaiming-normal (fan_in, leaky_relu) weights, zero biases — matches
    nn.init.kaiming_normal_(w, a=negative_slope, mode='fan_in',
    nonlinearity='leaky_relu'); weights stored as [in, out] (transpose of
    nn.Linear.weight) so the kernel computes x @ W + b directly."""
    gain = (2.0 / (1.0 + negative_slope ** 2)) ** 0.5

    def kaiming(k, fan_in, fan_out):
        std = gain / (fan_in ** 0.5)
        return std * jax.random.normal(k, (fan_in, fan_out), dtype=jnp.float32)

    k1, k2, k3 = jax.random.split(key, 3)
    w1 = kaiming(k1, input_size, hidden_sizes[0])
    b1 = jnp.zeros((1, hidden_sizes[0]), jnp.float32)
    w2 = kaiming(k2, hidden_sizes[0], hidden_sizes[1])
    b2 = jnp.zeros((1, hidden_sizes[1]), jnp.float32)
    w3 = kaiming(k3, hidden_sizes[1], output_size)
    b3 = jnp.zeros((1, output_size), jnp.float32)
    return (w1, b1, w2, b2, w3, b3)


def mlp_bert_reference(x, params, negative_slope, act_dtype):
    """Plain-JAX reference mirroring the kernel's bf16-operand / f32-accum /
    act_dtype-activation math."""
    w1, b1, w2, b2, w3, b3 = params

    def dense(a, w, b):
        return jnp.dot(a.astype(jnp.bfloat16), w.astype(jnp.bfloat16),
                       preferred_element_type=jnp.float32) + b

    def lrelu(h):
        h = h.astype(act_dtype)
        return jnp.where(h >= 0, h, h * negative_slope)

    h = lrelu(dense(x, w1, b1))
    h = lrelu(dense(h, w2, b2))
    return dense(h, w3, b3)


if __name__ == "__main__":
    # Small shapes consistent with the module's forward:
    # batch=16 BERT embeddings of size 32, hidden_sizes=[64, 32], 4 classes.
    batch = 16
    input_size = 32
    hidden_sizes = (64, 32)
    output_size = 4
    negative_slope = 0.01

    key = jax.random.PRNGKey(0)
    k_x, k_p = jax.random.split(key)

    x = jax.random.normal(k_x, (batch, input_size), dtype=jnp.float32)
    params = init_params(k_p, input_size, hidden_sizes, output_size,
                         negative_slope)
    packed = pack_params(params)   # one-time pad + bf16 cast (outside forward)

    logits = mlp_bert_forward(x, packed, negative_slope=negative_slope)
    logits = jax.block_until_ready(logits)

    act_dtype = jnp.float32 if "v5" in _tpu_kind() else jnp.bfloat16
    ref = mlp_bert_reference(x, params, negative_slope, act_dtype)
    assert logits.shape == (batch, output_size), logits.shape
    assert jnp.allclose(logits, ref, atol=1e-3, rtol=1e-3), (
        float(jnp.max(jnp.abs(logits - ref))))

    print("KERNEL_OK")
</pallas_src>

<mosaic_0001>
module attributes {stable_mosaic.version = 11 : i64} {
  func.func @_mlp_kernel(%arg0: i32, %arg1: memref<8x32xf32, #tpu.memory_space<vmem>>, %arg2: memref<32x128xbf16, #tpu.memory_space<vmem>>, %arg3: memref<1x128xf32, #tpu.memory_space<vmem>>, %arg4: memref<128x128xbf16, #tpu.memory_space<vmem>>, %arg5: memref<1x128xf32, #tpu.memory_space<vmem>>, %arg6: memref<128x4xbf16, #tpu.memory_space<vmem>>, %arg7: memref<1x4xf32, #tpu.memory_space<vmem>>, %arg8: memref<8x4xf32, #tpu.memory_space<vmem>>) attributes {dimension_semantics = [#tpu.dimension_semantics<parallel>], iteration_bounds = array<i64: 2>, scalar_prefetch = 0 : i64, scratch_operands = 0 : i64, tpu.core_type = #tpu.core_type<tc>, window_params = [{transform_indices = @transform_0, window_bounds = array<i64: 8, 32>}, {pipeline_mode = #tpu.pipeline_mode<synchronous>, transform_indices = @transform_1, window_bounds = array<i64: 32, 128>}, {pipeline_mode = #tpu.pipeline_mode<synchronous>, transform_indices = @transform_2, window_bounds = array<i64: 1, 128>}, {pipeline_mode = #tpu.pipeline_mode<synchronous>, transform_indices = @transform_3, window_bounds = array<i64: 128, 128>}, {pipeline_mode = #tpu.pipeline_mode<synchronous>, transform_indices = @transform_4, window_bounds = array<i64: 1, 128>}, {pipeline_mode = #tpu.pipeline_mode<synchronous>, transform_indices = @transform_5, window_bounds = array<i64: 128, 4>}, {pipeline_mode = #tpu.pipeline_mode<synchronous>, transform_indices = @transform_6, window_bounds = array<i64: 1, 4>}, {transform_indices = @transform_7, window_bounds = array<i64: 8, 4>}]} {
    %c0 = arith.constant 0 : index
    %c0_0 = arith.constant 0 : index
    %0 = vector.load %arg1[%c0, %c0_0] : memref<8x32xf32, #tpu.memory_space<vmem>>, vector<8x32xf32>
    %1 = arith.truncf %0 : vector<8x32xf32> to vector<8x32xbf16>
    %c0_1 = arith.constant 0 : index
    %c0_2 = arith.constant 0 : index
    %2 = vector.load %arg2[%c0_1, %c0_2] : memref<32x128xbf16, #tpu.memory_space<vmem>>, vector<32x128xbf16>
    %cst = arith.constant dense<0.000000e+00> : vector<8x128xf32>
    %3 = tpu.matmul %1, %2, %cst {dimension_numbers = #tpu.dot_dimension_numbers<[1], [0], [0], [1], [0, 0, 1, 1], [], []>} : vector<8x32xbf16>, vector<32x128xbf16>, vector<8x128xf32> -> vector<8x128xf32>
    %c0_3 = arith.constant 0 : index
    %c0_4 = arith.constant 0 : index
    %4 = vector.load %arg3[%c0_3, %c0_4] : memref<1x128xf32, #tpu.memory_space<vmem>>, vector<1x128xf32>
    %5 = vector.broadcast %4 : vector<1x128xf32> to vector<8x128xf32>
    %6 = arith.addf %3, %5 : vector<8x128xf32>
    %7 = arith.truncf %6 : vector<8x128xf32> to vector<8x128xbf16>
    %cst_5 = arith.constant 0.000000e+00 : bf16
    %8 = vector.broadcast %cst_5 : bf16 to vector<8x128xbf16>
    %9 = arith.cmpf oge, %7, %8 : vector<8x128xbf16>
    %cst_6 = arith.constant 1.000980e-02 : bf16
    %10 = vector.broadcast %cst_6 : bf16 to vector<8x128xbf16>
    %11 = arith.mulf %7, %10 : vector<8x128xbf16>
    %12 = arith.select %9, %7, %11 : vector<8x128xi1>, vector<8x128xbf16>
    %c0_7 = arith.constant 0 : index
    %c0_8 = arith.constant 0 : index
    %13 = vector.load %arg4[%c0_7, %c0_8] : memref<128x128xbf16, #tpu.memory_space<vmem>>, vector<128x128xbf16>
    %cst_9 = arith.constant dense<0.000000e+00> : vector<8x128xf32>
    %14 = tpu.matmul %12, %13, %cst_9 {dimension_numbers = #tpu.dot_dimension_numbers<[1], [0], [0], [1], [0, 0, 1, 1], [], []>} : vector<8x128xbf16>, vector<128x128xbf16>, vector<8x128xf32> -> vector<8x128xf32>
    %c0_10 = arith.constant 0 : index
    %c0_11 = arith.constant 0 : index
    %15 = vector.load %arg5[%c0_10, %c0_11] : memref<1x128xf32, #tpu.memory_space<vmem>>, vector<1x128xf32>
    %16 = vector.broadcast %15 : vector<1x128xf32> to vector<8x128xf32>
    %17 = arith.addf %14, %16 : vector<8x128xf32>
    %18 = arith.truncf %17 : vector<8x128xf32> to vector<8x128xbf16>
    %cst_12 = arith.constant 0.000000e+00 : bf16
    %19 = vector.broadcast %cst_12 : bf16 to vector<8x128xbf16>
    %20 = arith.cmpf oge, %18, %19 : vector<8x128xbf16>
    %cst_13 = arith.constant 1.000980e-02 : bf16
    %21 = vector.broadcast %cst_13 : bf16 to vector<8x128xbf16>
    %22 = arith.mulf %18, %21 : vector<8x128xbf16>
    %23 = arith.select %20, %18, %22 : vector<8x128xi1>, vector<8x128xbf16>
    %c0_14 = arith.constant 0 : index
    %c0_15 = arith.constant 0 : index
    %24 = vector.load %arg6[%c0_14, %c0_15] : memref<128x4xbf16, #tpu.memory_space<vmem>>, vector<128x4xbf16>
    %cst_16 = arith.constant dense<0.000000e+00> : vector<8x4xf32>
    %25 = tpu.matmul %23, %24, %cst_16 {dimension_numbers = #tpu.dot_dimension_numbers<[1], [0], [0], [1], [0, 0, 1, 1], [], []>} : vector<8x128xbf16>, vector<128x4xbf16>, vector<8x4xf32> -> vector<8x4xf32>
    %c0_17 = arith.constant 0 : index
    %c0_18 = arith.constant 0 : index
    %26 = vector.load %arg7[%c0_17, %c0_18] : memref<1x4xf32, #tpu.memory_space<vmem>>, vector<1x4xf32>
    %27 = vector.broadcast %26 : vector<1x4xf32> to vector<8x4xf32>
    %28 = arith.addf %25, %27 : vector<8x4xf32>
    %c0_19 = arith.constant 0 : index
    %c0_20 = arith.constant 0 : index
    %29 = vector.load %arg8[%c0_19, %c0_20] : memref<8x4xf32, #tpu.memory_space<vmem>>, vector<8x4xf32>
    tpu.vector_store %arg8[%c0_19, %c0_20], %28 {strides = array<i32>} : memref<8x4xf32, #tpu.memory_space<vmem>>, vector<8x4xf32>,
    return
  }
  func.func @transform_0(%arg0: i32) -> (i32, i32) {
    %c0_i32 = arith.constant 0 : i32
    %c0_i32_0 = arith.constant 0 : i32
    return %arg0, %c0_i32 : i32, i32
  }
  func.func @transform_1(%arg0: i32) -> (i32, i32) {
    %c0_i32 = arith.constant 0 : i32
    %c0_i32_0 = arith.constant 0 : i32
    %c0_i32_1 = arith.constant 0 : i32
    return %c0_i32, %c0_i32_0 : i32, i32
  }
  func.func @transform_2(%arg0: i32) -> (i32, i32) {
    %c0_i32 = arith.constant 0 : i32
    %c0_i32_0 = arith.constant 0 : i32
    %c0_i32_1 = arith.constant 0 : i32
    return %c0_i32, %c0_i32_0 : i32, i32
  }
  func.func @transform_3(%arg0: i32) -> (i32, i32) {
    %c0_i32 = arith.constant 0 : i32
    %c0_i32_0 = arith.constant 0 : i32
    %c0_i32_1 = arith.constant 0 : i32
    return %c0_i32, %c0_i32_0 : i32, i32
  }
  func.func @transform_4(%arg0: i32) -> (i32, i32) {
    %c0_i32 = arith.constant 0 : i32
    %c0_i32_0 = arith.constant 0 : i32
    %c0_i32_1 = arith.constant 0 : i32
    return %c0_i32, %c0_i32_0 : i32, i32
  }
  func.func @transform_5(%arg0: i32) -> (i32, i32) {
    %c0_i32 = arith.constant 0 : i32
    %c0_i32_0 = arith.constant 0 : i32
    %c0_i32_1 = arith.constant 0 : i32
    return %c0_i32, %c0_i32_0 : i32, i32
  }
  func.func @transform_6(%arg0: i32) -> (i32, i32) {
    %c0_i32 = arith.constant 0 : i32
    %c0_i32_0 = arith.constant 0 : i32
    %c0_i32_1 = arith.constant 0 : i32
    return %c0_i32, %c0_i32_0 : i32, i32
  }
  func.func @transform_7(%arg0: i32) -> (i32, i32) {
    %c0_i32 = arith.constant 0 : i32
    %c0_i32_0 = arith.constant 0 : i32
    return %arg0, %c0_i32 : i32, i32
  }
}

module attributes {stable_mosaic.version = 11 : i64} {
  func.func @_mlp_kernel(%arg0: i32, %arg1: memref<8x32xf32, #tpu.memory_space<vmem>>, %arg2: memref<32x128xbf16, #tpu.memory_space<vmem>>, %arg3: memref<1x128xf32, #tpu.memory_space<vmem>>, %arg4: memref<128x128xbf16, #tpu.memory_space<vmem>>, %arg5: memref<1x128xf32, #tpu.memory_space<vmem>>, %arg6: memref<128x4xbf16, #tpu.memory_space<vmem>>, %arg7: memref<1x4xf32, #tpu.memory_space<vmem>>, %arg8: memref<8x4xf32, #tpu.memory_space<vmem>>) attributes {dimension_semantics = [#tpu.dimension_semantics<parallel>], iteration_bounds = array<i64: 2>, scalar_prefetch = 0 : i64, scratch_operands = 0 : i64, tpu.core_type = #tpu.core_type<tc>, window_params = [{transform_indices = @transform_0, window_bounds = array<i64: 8, 32>}, {pipeline_mode = #tpu.pipeline_mode<synchronous>, transform_indices = @transform_1, window_bounds = array<i64: 32, 128>}, {pipeline_mode = #tpu.pipeline_mode<synchronous>, transform_indices = @transform_2, window_bounds = array<i64: 1, 128>}, {pipeline_mode = #tpu.pipeline_mode<synchronous>, transform_indices = @transform_3, window_bounds = array<i64: 128, 128>}, {pipeline_mode = #tpu.pipeline_mode<synchronous>, transform_indices = @transform_4, window_bounds = array<i64: 1, 128>}, {pipeline_mode = #tpu.pipeline_mode<synchronous>, transform_indices = @transform_5, window_bounds = array<i64: 128, 4>}, {pipeline_mode = #tpu.pipeline_mode<synchronous>, transform_indices = @transform_6, window_bounds = array<i64: 1, 4>}, {transform_indices = @transform_7, window_bounds = array<i64: 8, 4>}]} {
    %c0 = arith.constant 0 : index
    %c0_0 = arith.constant 0 : index
    %0 = vector.load %arg1[%c0, %c0_0] : memref<8x32xf32, #tpu.memory_space<vmem>>, vector<8x32xf32>
    %1 = arith.truncf %0 : vector<8x32xf32> to vector<8x32xbf16>
    %c0_1 = arith.constant 0 : index
    %c0_2 = arith.constant 0 : index
    %2 = vector.load %arg2[%c0_1, %c0_2] : memref<32x128xbf16, #tpu.memory_space<vmem>>, vector<32x128xbf16>
    %cst = arith.constant dense<0.000000e+00> : vector<8x128xf32>
    %3 = tpu.matmul %1, %2, %cst {dimension_numbers = #tpu.dot_dimension_numbers<[1], [0], [0], [1], [0, 0, 1, 1], [], []>} : vector<8x32xbf16>, vector<32x128xbf16>, vector<8x128xf32> -> vector<8x128xf32>
    %c0_3 = arith.constant 0 : index
    %c0_4 = arith.constant 0 : index
    %4 = vector.load %arg3[%c0_3, %c0_4] : memref<1x128xf32, #tpu.memory_space<vmem>>, vector<1x128xf32>
    %5 = vector.broadcast %4 : vector<1x128xf32> to vector<8x128xf32>
    %6 = arith.addf %3, %5 : vector<8x128xf32>
    %7 = arith.truncf %6 : vector<8x128xf32> to vector<8x128xbf16>
    %cst_5 = arith.constant 0.000000e+00 : bf16
    %8 = vector.broadcast %cst_5 : bf16 to vector<8x128xbf16>
    %9 = arith.cmpf oge, %7, %8 : vector<8x128xbf16>
    %cst_6 = arith.constant 1.000980e-02 : bf16
    %10 = vector.broadcast %cst_6 : bf16 to vector<8x128xbf16>
    %11 = arith.mulf %7, %10 : vector<8x128xbf16>
    %12 = arith.select %9, %7, %11 : vector<8x128xi1>, vector<8x128xbf16>
    %c0_7 = arith.constant 0 : index
    %c0_8 = arith.constant 0 : index
    %13 = vector.load %arg4[%c0_7, %c0_8] : memref<128x128xbf16, #tpu.memory_space<vmem>>, vector<128x128xbf16>
    %cst_9 = arith.constant dense<0.000000e+00> : vector<8x128xf32>
    %14 = tpu.matmul %12, %13, %cst_9 {dimension_numbers = #tpu.dot_dimension_numbers<[1], [0], [0], [1], [0, 0, 1, 1], [], []>} : vector<8x128xbf16>, vector<128x128xbf16>, vector<8x128xf32> -> vector<8x128xf32>
    %c0_10 = arith.constant 0 : index
    %c0_11 = arith.constant 0 : index
    %15 = vector.load %arg5[%c0_10, %c0_11] : memref<1x128xf32, #tpu.memory_space<vmem>>, vector<1x128xf32>
    %16 = vector.broadcast %15 : vector<1x128xf32> to vector<8x128xf32>
    %17 = arith.addf %14, %16 : vector<8x128xf32>
    %18 = arith.truncf %17 : vector<8x128xf32> to vector<8x128xbf16>
    %cst_12 = arith.constant 0.000000e+00 : bf16
    %19 = vector.broadcast %cst_12 : bf16 to vector<8x128xbf16>
    %20 = arith.cmpf oge, %18, %19 : vector<8x128xbf16>
    %cst_13 = arith.constant 1.000980e-02 : bf16
    %21 = vector.broadcast %cst_13 : bf16 to vector<8x128xbf16>
    %22 = arith.mulf %18, %21 : vector<8x128xbf16>
    %23 = arith.select %20, %18, %22 : vector<8x128xi1>, vector<8x128xbf16>
    %c0_14 = arith.constant 0 : index
    %c0_15 = arith.constant 0 : index
    %24 = vector.load %arg6[%c0_14, %c0_15] : memref<128x4xbf16, #tpu.memory_space<vmem>>, vector<128x4xbf16>
    %cst_16 = arith.constant dense<0.000000e+00> : vector<8x4xf32>
    %25 = tpu.matmul %23, %24, %cst_16 {dimension_numbers = #tpu.dot_dimension_numbers<[1], [0], [0], [1], [0, 0, 1, 1], [], []>} : vector<8x128xbf16>, vector<128x4xbf16>, vector<8x4xf32> -> vector<8x4xf32>
    %c0_17 = arith.constant 0 : index
    %c0_18 = arith.constant 0 : index
    %26 = vector.load %arg7[%c0_17, %c0_18] : memref<1x4xf32, #tpu.memory_space<vmem>>, vector<1x4xf32>
    %27 = vector.broadcast %26 : vector<1x4xf32> to vector<8x4xf32>
    %28 = arith.addf %25, %27 : vector<8x4xf32>
    %c0_19 = arith.constant 0 : index
    %c0_20 = arith.constant 0 : index
    %29 = vector.load %arg8[%c0_19, %c0_20] : memref<8x4xf32, #tpu.memory_space<vmem>>, vector<8x4xf32>
    tpu.vector_store %arg8[%c0_19, %c0_20], %28 {strides = array<i32>} : memref<8x4xf32, #tpu.memory_space<vmem>>, vector<8x4xf32>,
    return
  }
  func.func @transform_0(%arg0: i32) -> (i32, i32) {
    %c0_i32 = arith.constant 0 : i32
    %c0_i32_0 = arith.constant 0 : i32
    return %arg0, %c0_i32 : i32, i32
  }
  func.func @transform_1(%arg0: i32) -> (i32, i32) {
    %c0_i32 = arith.constant 0 : i32
    %c0_i32_0 = arith.constant 0 : i32
    %c0_i32_1 = arith.constant 0 : i32
    return %c0_i32, %c0_i32_0 : i32, i32
  }
  func.func @transform_2(%arg0: i32) -> (i32, i32) {
    %c0_i32 = arith.constant 0 : i32
    %c0_i32_0 = arith.constant 0 : i32
    %c0_i32_1 = arith.constant 0 : i32
    return %c0_i32, %c0_i32_0 : i32, i32
  }
  func.func @transform_3(%arg0: i32) -> (i32, i32) {
    %c0_i32 = arith.constant 0 : i32
    %c0_i32_0 = arith.constant 0 : i32
    %c0_i32_1 = arith.constant 0 : i32
    return %c0_i32, %c0_i32_0 : i32, i32
  }
  func.func @transform_4(%arg0: i32) -> (i32, i32) {
    %c0_i32 = arith.constant 0 : i32
    %c0_i32_0 = arith.constant 0 : i32
    %c0_i32_1 = arith.constant 0 : i32
    return %c0_i32, %c0_i32_0 : i32, i32
  }
  func.func @transform_5(%arg0: i32) -> (i32, i32) {
    %c0_i32 = arith.constant 0 : i32
    %c0_i32_0 = arith.constant 0 : i32
    %c0_i32_1 = arith.constant 0 : i32
    return %c0_i32, %c0_i32_0 : i32, i32
  }
  func.func @transform_6(%arg0: i32) -> (i32, i32) {
    %c0_i32 = arith.constant 0 : i32
    %c0_i32_0 = arith.constant 0 : i32
    %c0_i32_1 = arith.constant 0 : i32
    return %c0_i32, %c0_i32_0 : i32, i32
  }
  func.func @transform_7(%arg0: i32) -> (i32, i32) {
    %c0_i32 = arith.constant 0 : i32
    %c0_i32_0 = arith.constant 0 : i32
    return %arg0, %c0_i32 : i32, i32
  }
}

</mosaic_0001>

<llo_original>
// kernel: tpu_custom_call.1
$region0: #{tpu_custom_call.1}
  #allocation0 [shape = 'u32[]', space=smem, size = 0x4, offset = 0x4, fixed_abs, tag = 'smem constant byte address 0x4 - core index']
  #allocation1 [shape = 'u32[72,128]{1,0:T(1,128)}', space=vmem, size = 0x9000, scoped, tag = 'internal scratch']
  %s0 = inlined_call_operand.hbm [shape: f32[16,32], index: 0, kind: input, shape index: {}]
  %s1 = inlined_call_operand.hbm [shape: bf16[32,128], index: 1, kind: input, shape index: {}]
  %s2 = inlined_call_operand.vmem [shape: f32[1,128], index: 2, kind: input, shape index: {}]
  %s3 = inlined_call_operand.vmem [shape: bf16[128,128], index: 3, kind: input, shape index: {}]
  %s4 = inlined_call_operand.vmem [shape: f32[1,128], index: 4, kind: input, shape index: {}]
  %s5 = inlined_call_operand.vmem [shape: bf16[128,4], index: 5, kind: input, shape index: {}]
  %s6 = inlined_call_operand.vmem [shape: f32[1,4], index: 6, kind: input, shape index: {}]
  %s7 = inlined_call_operand.vmem [shape: f32[16,4], index: 7, kind: output, shape index: {}]
  %s8 = sld [smem:[#allocation0]]
  $region69: #{tpu_custom_call.1} parent=0
    _
  %s10 = ssub.s32 1, %s8
  %s11 = scalar_select 0, %s10, %s8
  $region1: #{tpu_custom_call.1} parent=0
    #allocation2 [shape = 'u8[8192]{0}', space=vmem, size = 0x2000, scoped, tag = 'input window, operand 0']
    #allocation3 [shape = 's32[2]{0}', space=sflag, size = 0x8, scoped, tag = 'scoped memory for tpu_custom_call.1']
    #allocation4 [shape = 'u8[8192]{0}', space=vmem, size = 0x2000, scoped, tag = 'input window, operand 1, single buffered']
    #allocation5 [shape = 's32[1]{0}', space=sflag, size = 0x4, scoped, tag = 'scoped memory for tpu_custom_call.1']
    %12 = vsyncpa [#allocation3], 0
    %s13 = scalar_lea.sflag [#allocation3], 1
    %14 = vsyncpa %s13, 0
    %15 = vsyncpa [#allocation5], 0
    loop: start=0, step=1, limit=4
    $region2: #{tpu_custom_call.1} parent=1 // loop_pre_header
      _
    $region3: #{tpu_custom_call.1} parent=1 // loop_header
      %s17 = sphi 0, %s21
      %p18 = scmp.ge.s32.totalorder %s17, 4
      %s27 = sphi 0, %s29
      %s30 = sphi 0, %s27
      %s31 = sphi 0, %s30
      %s47 = sphi 0, %s31
      %s51 = sphi 0, %s51
      %s53 = sphi 0, %s51
      %s54 = sphi 0, %s53
      %s68 = sphi 0, %s54
      %s72 = sphi 0, %s72
      %s74 = sphi 0, %s72
      %s75 = sphi 0, %s74
      %s89 = sphi 0, %s75
      %s93 = sphi 0, %s93
      %s95 = sphi 0, %s93
      %s96 = sphi 0, %s95
      %s110 = sphi 0, %s96
      %s114 = sphi 0, %s114
      %s116 = sphi 0, %s114
      %s117 = sphi 0, %s116
      %s131 = sphi 0, %s117
      %s135 = sphi 0, %s135
      %s137 = sphi 0, %s135
      %s138 = sphi 0, %s137
      %s152 = sphi 0, %s138
      %s156 = sphi 0, %s156
      %s158 = sphi 0, %s156
      %s159 = sphi 0, %s158
      %s173 = sphi 0, %s159
      %s179 = sphi 0, %s181
      %s182 = sphi 0, %s179
      %s183 = sphi 0, %s182
      %s199 = sphi 0, %s183
    $region4: #{tpu_custom_call.1} parent=1 // loop_header_branch
      %20 = sbr.rel (%p18) target = $region8
    $region5: #{tpu_custom_call.1} parent=1 // loop_body
      %s22 = ssub.s32 %s17, 1
      %s23 = ssub.s32 %s17, 2
      %s24 = sadd.s32 %s17, 1
      %s25 = ssub.s32 %s17, %s24
      %p26 = scmp.eq.s32.totalorder %s25, 0
      %s28 = sadd.s32 %s27, 1
      %s29 = scalar_select %p26, %s27, %s28
      %p32 = pneg %p26
      %p33 = scmp.eq.s32.totalorder %s17, 1
      %p34 = por %p32, %p33
      %p35 = scmp.ne.s32.totalorder %s27, %s30
      %p36 = scmp.eq.s32.totalorder %s17, 0
      %p37 = por %p35, %p36
      %p38 = scmp.ne.s32.totalorder %s27, %s30
      %p39 = scmp.eq.s32.totalorder %s22, 1
      %p40 = por %p38, %p39
      %p41 = scmp.ne.s32.totalorder %s30, %s31
      %p42 = scmp.eq.s32.totalorder %s22, 0
      %p43 = por %p41, %p42
      %p44 = scmp.ne.s32.totalorder %s30, %s31
      %p45 = scmp.eq.s32.totalorder %s23, 1
      %p46 = por %p44, %p45
      %p48 = scmp.ne.s32.totalorder %s31, %s47
      %p49 = scmp.eq.s32.totalorder %s23, 0
      %p50 = por %p48, %p49
      %s52 = sadd.s32 %s51, 1
      %p55 = scmp.eq.s32.totalorder %s17, 1
      %p56 = scmp.ne.s32.totalorder %s51, %s53
      %p57 = scmp.eq.s32.totalorder %s17, 0
      %p58 = por %p56, %p57
      %p59 = scmp.ne.s32.totalorder %s51, %s53
      %p60 = scmp.eq.s32.totalorder %s22, 1
      %p61 = por %p59, %p60
      %p62 = scmp.ne.s32.totalorder %s53, %s54
      %p63 = scmp.eq.s32.totalorder %s22, 0
      %p64 = por %p62, %p63
      %p65 = scmp.ne.s32.totalorder %s53, %s54
      %p66 = scmp.eq.s32.totalorder %s23, 1
      %p67 = por %p65, %p66
      %p69 = scmp.ne.s32.totalorder %s54, %s68
      %p70 = scmp.eq.s32.totalorder %s23, 0
      %p71 = por %p69, %p70
      %s73 = sadd.s32 %s72, 1
      %p76 = scmp.eq.s32.totalorder %s17, 1
      %p77 = scmp.ne.s32.totalorder %s72, %s74
      %p78 = scmp.eq.s32.totalorder %s17, 0
      %p79 = por %p77, %p78
      %p80 = scmp.ne.s32.totalorder %s72, %s74
      %p81 = scmp.eq.s32.totalorder %s22, 1
      %p82 = por %p80, %p81
      %p83 = scmp.ne.s32.totalorder %s74, %s75
      %p84 = scmp.eq.s32.totalorder %s22, 0
      %p85 = por %p83, %p84
      %p86 = scmp.ne.s32.totalorder %s74, %s75
      %p87 = scmp.eq.s32.totalorder %s23, 1
      %p88 = por %p86, %p87
      %p90 = scmp.ne.s32.totalorder %s75, %s89
      %p91 = scmp.eq.s32.totalorder %s23, 0
      %p92 = por %p90, %p91
      %s94 = sadd.s32 %s93, 1
      %p97 = scmp.eq.s32.totalorder %s17, 1
      %p98 = scmp.ne.s32.totalorder %s93, %s95
      %p99 = scmp.eq.s32.totalorder %s17, 0
      %p100 = por %p98, %p99
      %p101 = scmp.ne.s32.totalorder %s93, %s95
      %p102 = scmp.eq.s32.totalorder %s22, 1
      %p103 = por %p101, %p102
      %p104 = scmp.ne.s32.totalorder %s95, %s96
      %p105 = scmp.eq.s32.totalorder %s22, 0
      %p106 = por %p104, %p105
      %p107 = scmp.ne.s32.totalorder %s95, %s96
      %p108 = scmp.eq.s32.totalorder %s23, 1
      %p109 = por %p107, %p108
      %p111 = scmp.ne.s32.totalorder %s96, %s110
      %p112 = scmp.eq.s32.totalorder %s23, 0
      %p113 = por %p111, %p112
      %s115 = sadd.s32 %s114, 1
      %p118 = scmp.eq.s32.totalorder %s17, 1
      %p119 = scmp.ne.s32.totalorder %s114, %s116
      %p120 = scmp.eq.s32.totalorder %s17, 0
      %p121 = por %p119, %p120
      %p122 = scmp.ne.s32.totalorder %s114, %s116
      %p123 = scmp.eq.s32.totalorder %s22, 1
      %p124 = por %p122, %p123
      %p125 = scmp.ne.s32.totalorder %s116, %s117
      %p126 = scmp.eq.s32.totalorder %s22, 0
      %p127 = por %p125, %p126
      %p128 = scmp.ne.s32.totalorder %s116, %s117
      %p129 = scmp.eq.s32.totalorder %s23, 1
      %p130 = por %p128, %p129
      %p132 = scmp.ne.s32.totalorder %s117, %s131
      %p133 = scmp.eq.s32.totalorder %s23, 0
      %p134 = por %p132, %p133
      %s136 = sadd.s32 %s135, 1
      %p139 = scmp.eq.s32.totalorder %s17, 1
      %p140 = scmp.ne.s32.totalorder %s135, %s137
      %p141 = scmp.eq.s32.totalorder %s17, 0
      %p142 = por %p140, %p141
      %p143 = scmp.ne.s32.totalorder %s135, %s137
      %p144 = scmp.eq.s32.totalorder %s22, 1
      %p145 = por %p143, %p144
      %p146 = scmp.ne.s32.totalorder %s137, %s138
      %p147 = scmp.eq.s32.totalorder %s22, 0
      %p148 = por %p146, %p147
      %p149 = scmp.ne.s32.totalorder %s137, %s138
      %p150 = scmp.eq.s32.totalorder %s23, 1
      %p151 = por %p149, %p150
      %p153 = scmp.ne.s32.totalorder %s138, %s152
      %p154 = scmp.eq.s32.totalorder %s23, 0
      %p155 = por %p153, %p154
      %s157 = sadd.s32 %s156, 1
      %p160 = scmp.eq.s32.totalorder %s17, 1
      %p161 = scmp.ne.s32.totalorder %s156, %s158
      %p162 = scmp.eq.s32.totalorder %s17, 0
      %p163 = por %p161, %p162
      %p164 = scmp.ne.s32.totalorder %s156, %s158
      %p165 = scmp.eq.s32.totalorder %s22, 1
      %p166 = por %p164, %p165
      %p167 = scmp.ne.s32.totalorder %s158, %s159
      %p168 = scmp.eq.s32.totalorder %s22, 0
      %p169 = por %p167, %p168
      %p170 = scmp.ne.s32.totalorder %s158, %s159
      %p171 = scmp.eq.s32.totalorder %s23, 1
      %p172 = por %p170, %p171
      %p174 = scmp.ne.s32.totalorder %s159, %s173
      %p175 = scmp.eq.s32.totalorder %s23, 0
      %p176 = por %p174, %p175
      %s177 = ssub.s32 %s17, %s24
      %p178 = scmp.eq.s32.totalorder %s177, 0
      %s180 = sadd.s32 %s179, 1
      %s181 = scalar_select %p178, %s179, %s180
      %p184 = pneg %p178
      %p185 = scmp.eq.s32.totalorder %s17, 1
      %p186 = por %p184, %p185
      %p187 = scmp.ne.s32.totalorder %s179, %s182
      %p188 = scmp.eq.s32.totalorder %s17, 0
      %p189 = por %p187, %p188
      %p190 = scmp.ne.s32.totalorder %s179, %s182
      %p191 = scmp.eq.s32.totalorder %s22, 1
      %p192 = por %p190, %p191
      %p193 = scmp.ne.s32.totalorder %s182, %s183
      %p194 = scmp.eq.s32.totalorder %s22, 0
      %p195 = por %p193, %p194
      %p196 = scmp.ne.s32.totalorder %s182, %s183
      %p197 = scmp.eq.s32.totalorder %s23, 1
      %p198 = por %p196, %p197
      %p200 = scmp.ne.s32.totalorder %s183, %s199
      %p201 = scmp.eq.s32.totalorder %s23, 0
      %p202 = por %p200, %p201
      %p203 = scmp.le.s32.totalorder 1, %s17
      %p204 = scmp.lt.s32.totalorder %s17, 3
      %p205 = pnand %p203, %p204
      %p206 = pneg %p205
      // Predicated region
      $region9: #{tpu_custom_call.1} parent=5 // pred_check
        _
      $region10: #{tpu_custom_call.1} parent=5 // pred_check_branch
        %208 = sbr.rel (%p205) target = $region12
      $region11: #{tpu_custom_call.1} parent=5 // pred_region
        %s209 = ssub.s32 %s17, 1
        // Predicated region
        $region13: #{tpu_custom_call.1} parent=11 // pred_check
          %p210 = pneg %p64
        $region14: #{tpu_custom_call.1} parent=11 // pred_check_branch
          %212 = sbr.rel (%p210) target = $region16
        $region15: #{tpu_custom_call.1} parent=11 // pred_region
          %214 = vsyncadd [#allocation5], 0
          %s215 = sshll.u32 %s1, 4
          %s216 = int_to_ptr.hbm [resolvable:$true] %s215
          %s217 = sshll.u32 [#allocation4], 4
          %s218 = int_to_ptr.vmem [resolvable:$true] %s217
          %223 = dma.hbm_to_vmem [thread:$0]  %s216, 256, %s218, [#allocation5], 64, 64, 4
        $region16: #{tpu_custom_call.1} parent=11 // pred_fallthru
          _
        // Predicated region
        $region17: #{tpu_custom_call.1} parent=11 // pred_check
          %p224 = pneg %p85
        $region18: #{tpu_custom_call.1} parent=11 // pred_check_branch
          %226 = sbr.rel (%p224) target = $region20
        $region19: #{tpu_custom_call.1} parent=11 // pred_region
          _
        $region20: #{tpu_custom_call.1} parent=11 // pred_fallthru
          _
        // Predicated region
        $region21: #{tpu_custom_call.1} parent=11 // pred_check
          %p227 = pneg %p106
        $region22: #{tpu_custom_call.1} parent=11 // pred_check_branch
          %229 = sbr.rel (%p227) target = $region24
        $region23: #{tpu_custom_call.1} parent=11 // pred_region
          _
        $region24: #{tpu_custom_call.1} parent=11 // pred_fallthru
          _
        // Predicated region
        $region25: #{tpu_custom_call.1} parent=11 // pred_check
          %p230 = pneg %p127
        $region26: #{tpu_custom_call.1} parent=11 // pred_check_branch
          %232 = sbr.rel (%p230) target = $region28
        $region27: #{tpu_custom_call.1} parent=11 // pred_region
          _
        $region28: #{tpu_custom_call.1} parent=11 // pred_fallthru
          _
        // Predicated region
        $region29: #{tpu_custom_call.1} parent=11 // pred_check
          %p233 = pneg %p148
        $region30: #{tpu_custom_call.1} parent=11 // pred_check_branch
          %235 = sbr.rel (%p233) target = $region32
        $region31: #{tpu_custom_call.1} parent=11 // pred_region
          _
        $region32: #{tpu_custom_call.1} parent=11 // pred_fallthru
          _
        // Predicated region
        $region33: #{tpu_custom_call.1} parent=11 // pred_check
          %p236 = pneg %p169
        $region34: #{tpu_custom_call.1} parent=11 // pred_check_branch
          %238 = sbr.rel (%p236) target = $region36
        $region35: #{tpu_custom_call.1} parent=11 // pred_region
          _
        $region36: #{tpu_custom_call.1} parent=11 // pred_fallthru
          _
      $region12: #{tpu_custom_call.1} parent=5 // pred_fallthru
        _
      %p239 = scmp.lt.s32.totalorder %s17, 2
      // Predicated region
      $region37: #{tpu_custom_call.1} parent=5 // pred_check
        %p240 = pneg %p239
      $region38: #{tpu_custom_call.1} parent=5 // pred_check_branch
        %242 = sbr.rel (%p240) target = $region40
      $region39: #{tpu_custom_call.1} parent=5 // pred_region
        // Predicated region
        $region41: #{tpu_custom_call.1} parent=39 // pred_check
          %p243 = pneg %p37
        $region42: #{tpu_custom_call.1} parent=39 // pred_check_branch
          %245 = sbr.rel (%p243) target = $region44
        $region43: #{tpu_custom_call.1} parent=39 // pred_region
          %s246 = sand.u32 %s27, 1
          %s247 = scalar_lea.sflag [#allocation3], %s246
          %s248 = sand.u32 %s27, 1
          %s249 = smul.addr %s248, 8
          %s250 = scalar_lea.vmem [#allocation2], %s249
          %252 = vsyncadd %s247, 0
          %s253 = smul.addr %s17, 8
          %s254 = scalar_lea.hbm %s0, %s253
          %s256 = sshll.u32 %s254, 4
          %s257 = int_to_ptr.hbm [resolvable:$true] %s256
          %s258 = sshll.u32 %s250, 4
          %s259 = int_to_ptr.vmem [resolvable:$true] %s258
          %261 = dma.hbm_to_vmem [thread:$0]  %s257, 128, %s259, %s247
        $region44: #{tpu_custom_call.1} parent=39 // pred_fallthru
          _
      $region40: #{tpu_custom_call.1} parent=5 // pred_fallthru
        _
      %p262 = scmp.le.s32.totalorder 1, %s17
      %p263 = scmp.lt.s32.totalorder %s17, 3
      %p264 = pnand %p262, %p263
      %p265 = pneg %p264
      // Predicated region
      $region45: #{tpu_custom_call.1} parent=5 // pred_check
        _
      $region46: #{tpu_custom_call.1} parent=5 // pred_check_branch
        %267 = sbr.rel (%p264) target = $region48
      $region47: #{tpu_custom_call.1} parent=5 // pred_region
        %s268 = ssub.s32 %s17, 1
        %s269 = sand.u32 %s30, 1
        %s270 = scalar_lea.sflag [#allocation3], %s269
        %s271 = sand.u32 %s30, 1
        %s272 = smul.addr %s271, 8
        %s273 = scalar_lea.vmem [#allocation2], %s272
        // Predicated region
        $region49: #{tpu_custom_call.1} parent=47 // pred_check
          %p274 = pneg %p43
        $region50: #{tpu_custom_call.1} parent=47 // pred_check_branch
          %276 = sbr.rel (%p274) target = $region52
        $region51: #{tpu_custom_call.1} parent=47 // pred_region
          %278 = dma.done %s270, 128
        $region52: #{tpu_custom_call.1} parent=47 // pred_fallthru
          _
        // Predicated region
        $region53: #{tpu_custom_call.1} parent=47 // pred_check
          %p279 = pneg %p64
        $region54: #{tpu_custom_call.1} parent=47 // pred_check_branch
          %281 = sbr.rel (%p279) target = $region56
        $region55: #{tpu_custom_call.1} parent=47 // pred_region
          %283 = dma.done [#allocation5], 256
        $region56: #{tpu_custom_call.1} parent=47 // pred_fallthru
          _
        %s284 = sand.u32 %s30, 1
        %s285 = scalar_lea.sflag [#allocation3], %s284
        %s286 = sand.u32 %s30, 1
        %s287 = smul.addr %s286, 8
        %s288 = scalar_lea.vmem [#allocation2], %s287
        %p289 = pneg %p43
        %p290 = pneg %p40
        %p291 = pneg %p64
        %p292 = pneg %p61
        %p293 = pneg %p85
        %p294 = pneg %p82
        %p295 = pneg %p106
        %p296 = pneg %p103
        %p297 = pneg %p127
        %p298 = pneg %p124
        %p299 = pneg %p148
        %p300 = pneg %p145
        %p301 = pneg %p169
        %p302 = pneg %p166
        %p303 = pneg %p195
        %p304 = pneg %p192
        %p305 = scmp.lt.s32.totalorder %s22, 1
        %s306 = scalar_select %p305, %s22, 1
        %s307 = smul.addr %s306, 8
        %s308 = scalar_lea.vmem %s7, %s307
        %p309 = scmp.lt.s32.totalorder %s22, 1
        %s310 = scalar_select %p309, %s22, 1
        %s311 = smul.addr %s310, 8
        %s312 = scalar_lea.vmem %s7, %s311
        %v314 = vld [vmem:[%s273] sm:$0xff]
        %v315 = vpack.c.bf16 %v314, %v314
        %v316 = vld [vmem:[#allocation4] sm:$0xf]
        %v317 = vld [vmem:[#allocation4 + $0x4] sm:$0xf]
        %v318 = vld [vmem:[#allocation4 + $0x8] sm:$0xf]
        %v319 = vld [vmem:[#allocation4 + $0xc] sm:$0xf]
        %v320 = vld [vmem:[%s2] sm:$0x1]
        %v322 = vperm.slane %v320, 0
        %v328 = vunpack.c.l.b16 %v316
        %v329 = vunpack.c.l.b16 %v317
        %v330 = vunpack.c.l.b16 %v318
        %v331 = vunpack.c.l.b16 %v319
        %v332 = vpack.c.b16 %v329, %v328
        %v333 = vpack.c.b16 %v331, %v330
        %vm336 = vcmask 261120
        %v338 = vsel %vm336, %v315, 0
        %340 = vmatpush.bf16.msra.mxu0 0
        %341 = vmatpush.bf16.msra.mxu0 0
        %342 = vmatpush.bf16.msra.mxu0 0
        %343 = vmatpush.bf16.msra.mxu0 0
        %344 = vmatpush.bf16.msra.mxu0 0
        %345 = vmatpush.bf16.msra.mxu0 0
        %346 = vmatpush.bf16.msra.mxu0 %v333
        %347 = vmatpush.bf16.msra.mxu0 %v332
        %348 = vmatmul.bf16.gmra.mxu0 %v338
        %v349 = vpop.f32.mrf.mxu0
        %v350 = vadd.f32 %v322, %v349
        %v351 = vpop.f32.mrf.mxu0
        %352 = vdwg.mxu0
        %v353 = vpack.c.bf16 %v350, %v350
        %v354 = vunpack.c.l.bf16 %v353
        %vm355 = vcmp.ge.f32.partialorder %v354, 0.0
        %v356 = vmul.f32 %v354, 0.010009766
        %v357 = vpack.c.bf16 %v356, %v356
        %vm358 = vmpackc.low %vm355, %vm355
        %v359 = vsel %vm358, %v353, %v357
        %v360 = vld [vmem:[%s3] sm:$0xf]
        %v361 = vld [vmem:[%s3 + $0x4] sm:$0xf]
        %v362 = vld [vmem:[%s3 + $0x8] sm:$0xf]
        %v363 = vld [vmem:[%s3 + $0xc] sm:$0xf]
        %v364 = vld [vmem:[%s3 + $0x10] sm:$0xf]
        %v365 = vld [vmem:[%s3 + $0x14] sm:$0xf]
        %v366 = vld [vmem:[%s3 + $0x18] sm:$0xf]
        %v367 = vld [vmem:[%s3 + $0x1c] sm:$0xf]
        %v368 = vld [vmem:[%s3 + $0x20] sm:$0xf]
        %v369 = vld [vmem:[%s3 + $0x24] sm:$0xf]
        %v370 = vld [vmem:[%s3 + $0x28] sm:$0xf]
        %v371 = vld [vmem:[%s3 + $0x2c] sm:$0xf]
        %v372 = vld [vmem:[%s3 + $0x30] sm:$0xf]
        %v373 = vld [vmem:[%s3 + $0x34] sm:$0xf]
        %v374 = vld [vmem:[%s3 + $0x38] sm:$0xf]
        %v375 = vld [vmem:[%s3 + $0x3c] sm:$0xf]
        %v376 = vld [vmem:[%s4] sm:$0x1]
        %v378 = vperm.slane %v376, 0
        %v396 = vunpack.c.l.b16 %v360
        %v397 = vunpack.c.l.b16 %v361
        %v398 = vunpack.c.l.b16 %v362
        %v399 = vunpack.c.l.b16 %v363
        %v400 = vunpack.c.l.b16 %v364
        %v401 = vunpack.c.l.b16 %v365
        %v402 = vunpack.c.l.b16 %v366
        %v403 = vunpack.c.l.b16 %v367
        %v404 = vunpack.c.l.b16 %v368
        %v405 = vunpack.c.l.b16 %v369
        %v406 = vunpack.c.l.b16 %v370
        %v407 = vunpack.c.l.b16 %v371
        %v408 = vunpack.c.l.b16 %v372
        %v409 = vunpack.c.l.b16 %v373
        %v410 = vunpack.c.l.b16 %v374
        %v411 = vunpack.c.l.b16 %v375
        %v412 = vpack.c.b16 %v397, %v396
        %v413 = vpack.c.b16 %v399, %v398
        %v414 = vpack.c.b16 %v401, %v400
        %v415 = vpack.c.b16 %v403, %v402
        %v416 = vpack.c.b16 %v405, %v404
        %v417 = vpack.c.b16 %v407, %v406
        %v418 = vpack.c.b16 %v409, %v408
        %v419 = vpack.c.b16 %v411, %v410
        %428 = vmatpush.bf16.msra.mxu0 %v419
        %429 = vmatpush.bf16.msra.mxu0 %v418
        %430 = vmatpush.bf16.msra.mxu0 %v417
        %431 = vmatpush.bf16.msra.mxu0 %v416
        %432 = vmatpush.bf16.msra.mxu0 %v415
        %433 = vmatpush.bf16.msra.mxu0 %v414
        %434 = vmatpush.bf16.msra.mxu0 %v413
        %435 = vmatpush.bf16.msra.mxu0 %v412
        %436 = vmatmul.bf16.gmra.mxu0 %v359
        %v437 = vpop.f32.mrf.mxu0
        %v438 = vadd.f32 %v378, %v437
        %v439 = vpop.f32.mrf.mxu0
        %440 = vdwg.mxu0
        %v441 = vpack.c.bf16 %v438, %v438
        %v442 = vunpack.c.l.bf16 %v441
        %vm443 = vcmp.ge.f32.partialorder %v442, 0.0
        %v444 = vmul.f32 %v442, 0.010009766
        %v445 = vpack.c.bf16 %v444, %v444
        %vm446 = vmpackc.low %vm443, %vm443
        %v447 = vsel %vm446, %v441, %v445
        %v448 = vld [vmem:[%s5] sm:$0xf]
        %v449 = vld [vmem:[%s5 + $0x4] sm:$0xf]
        %v450 = vld [vmem:[%s5 + $0x8] sm:$0xf]
        %v451 = vld [vmem:[%s5 + $0xc] sm:$0xf]
        %v452 = vld [vmem:[%s5 + $0x10] sm:$0xf]
        %v453 = vld [vmem:[%s5 + $0x14] sm:$0xf]
        %v454 = vld [vmem:[%s5 + $0x18] sm:$0xf]
        %v455 = vld [vmem:[%s5 + $0x1c] sm:$0xf]
        %v456 = vld [vmem:[%s5 + $0x20] sm:$0xf]
        %v457 = vld [vmem:[%s5 + $0x24] sm:$0xf]
        %v458 = vld [vmem:[%s5 + $0x28] sm:$0xf]
        %v459 = vld [vmem:[%s5 + $0x2c] sm:$0xf]
        %v460 = vld [vmem:[%s5 + $0x30] sm:$0xf]
        %v461 = vld [vmem:[%s5 + $0x34] sm:$0xf]
        %v462 = vld [vmem:[%s5 + $0x38] sm:$0xf]
        %v463 = vld [vmem:[%s5 + $0x3c] sm:$0xf]
        %v464 = vld [vmem:[%s6] sm:$0x1]
        %v466 = vperm.slane %v464, 0
        %v484 = vunpack.c.l.b16 %v448
        %v485 = vunpack.c.l.b16 %v449
        %v486 = vunpack.c.l.b16 %v450
        %v487 = vunpack.c.l.b16 %v451
        %v488 = vunpack.c.l.b16 %v452
        %v489 = vunpack.c.l.b16 %v453
        %v490 = vunpack.c.l.b16 %v454
        %v491 = vunpack.c.l.b16 %v455
        %v492 = vunpack.c.l.b16 %v456
        %v493 = vunpack.c.l.b16 %v457
        %v494 = vunpack.c.l.b16 %v458
        %v495 = vunpack.c.l.b16 %v459
        %v496 = vunpack.c.l.b16 %v460
        %v497 = vunpack.c.l.b16 %v461
        %v498 = vunpack.c.l.b16 %v462
        %v499 = vunpack.c.l.b16 %v463
        %v500 = vpack.c.b16 %v485, %v484
        %v501 = vpack.c.b16 %v487, %v486
        %v502 = vpack.c.b16 %v489, %v488
        %v503 = vpack.c.b16 %v491, %v490
        %v504 = vpack.c.b16 %v493, %v492
        %v505 = vpack.c.b16 %v495, %v494
        %v506 = vpack.c.b16 %v497, %v496
        %v507 = vpack.c.b16 %v499, %v498
        %516 = vmatpush.bf16.msra.mxu0 %v507
        %517 = vmatpush.bf16.msra.mxu0 %v506
        %518 = vmatpush.bf16.msra.mxu0 %v505
        %519 = vmatpush.bf16.msra.mxu0 %v504
        %520 = vmatpush.bf16.msra.mxu0 %v503
        %521 = vmatpush.bf16.msra.mxu0 %v502
        %522 = vmatpush.bf16.msra.mxu0 %v501
        %523 = vmatpush.bf16.msra.mxu0 %v500
        %524 = vmatmul.bf16.gmra.mxu0 %v447
        %v525 = vpop.f32.mrf.mxu0
        %v526 = vadd.f32 %v466, %v525
        %v527 = vpop.f32.mrf.mxu0
        %528 = vdwg.mxu0
        %vm529 = vcmask 31744
        %530 = vst.msk [vmem:[%s312] sm:$0xff] %vm529, %v526
        %p531 = scmp.lt.s32.totalorder %s22, 1
        %s532 = scalar_select %p531, %s22, 1
        %s533 = smul.addr %s532, 8
        %s534 = scalar_lea.vmem %s7, %s533
        // Predicated region
        $region57: #{tpu_custom_call.1} parent=47 // pred_check
          %p535 = pneg %p192
        $region58: #{tpu_custom_call.1} parent=47 // pred_check_branch
          %537 = sbr.rel (%p535) target = $region60
        $region59: #{tpu_custom_call.1} parent=47 // pred_region
          _
        $region60: #{tpu_custom_call.1} parent=47 // pred_fallthru
          _
      $region48: #{tpu_custom_call.1} parent=5 // pred_fallthru
        _
      %p538 = scmp.le.s32.totalorder 2, %s17
      // Predicated region
      $region61: #{tpu_custom_call.1} parent=5 // pred_check
        %p539 = pneg %p538
      $region62: #{tpu_custom_call.1} parent=5 // pred_check_branch
        %541 = sbr.rel (%p539) target = $region64
      $region63: #{tpu_custom_call.1} parent=5 // pred_region
        %s542 = ssub.s32 %s17, 2
        // Predicated region
        $region65: #{tpu_custom_call.1} parent=63 // pred_check
          %p543 = pneg %p198
        $region66: #{tpu_custom_call.1} parent=63 // pred_check_branch
          %545 = sbr.rel (%p543) target = $region68
        $region67: #{tpu_custom_call.1} parent=63 // pred_region
          %p546 = scmp.lt.s32.totalorder %s23, 1
          %s547 = scalar_select %p546, %s23, 1
          %s548 = smul.addr %s547, 8
          %s549 = scalar_lea.vmem %s7, %s548
        $region68: #{tpu_custom_call.1} parent=63 // pred_fallthru
          _
      $region64: #{tpu_custom_call.1} parent=5 // pred_fallthru
        _
    $region6: #{tpu_custom_call.1} parent=1 // loop_footer
      %s21 = sadd.s32 1, %s17
    $region7: #{tpu_custom_call.1} parent=1 // loop_footer_branch
      %16 = sbr.rel target = $region3
    $region8: #{tpu_custom_call.1} parent=1 // loop_exit
      _
    %550 = vsyncpa [#allocation3], 1
    %s551 = scalar_lea.sflag [#allocation3], 1
    %552 = vsyncpa %s551, 1
    %553 = vsyncpa [#allocation5], 1

// kernel: tpu_custom_call.1
$region0: #{tpu_custom_call.1}
  #allocation0 [shape = 'u32[]', space=smem, size = 0x4, offset = 0x4, fixed_abs, tag = 'smem constant byte address 0x4 - core index']
  #allocation1 [shape = 'u32[72,128]{1,0:T(1,128)}', space=vmem, size = 0x9000, scoped, tag = 'internal scratch']
  %s0 = inlined_call_operand.hbm [shape: f32[16,32], index: 0, kind: input, shape index: {}]
  %s1 = inlined_call_operand.hbm [shape: bf16[32,128], index: 1, kind: input, shape index: {}]
  %s2 = inlined_call_operand.vmem [shape: f32[1,128], index: 2, kind: input, shape index: {}]
  %s3 = inlined_call_operand.vmem [shape: bf16[128,128], index: 3, kind: input, shape index: {}]
  %s4 = inlined_call_operand.vmem [shape: f32[1,128], index: 4, kind: input, shape index: {}]
  %s5 = inlined_call_operand.vmem [shape: bf16[128,4], index: 5, kind: input, shape index: {}]
  %s6 = inlined_call_operand.vmem [shape: f32[1,4], index: 6, kind: input, shape index: {}]
  %s7 = inlined_call_operand.vmem [shape: f32[16,4], index: 7, kind: output, shape index: {}]
  %s8 = sld [smem:[#allocation0]]
  $region69: #{tpu_custom_call.1} parent=0
    _
  %s10 = ssub.s32 1, %s8
  %s11 = scalar_select 0, %s10, %s8
  $region1: #{tpu_custom_call.1} parent=0
    #allocation2 [shape = 'u8[8192]{0}', space=vmem, size = 0x2000, scoped, tag = 'input window, operand 0']
    #allocation3 [shape = 's32[2]{0}', space=sflag, size = 0x8, scoped, tag = 'scoped memory for tpu_custom_call.1']
    #allocation4 [shape = 'u8[8192]{0}', space=vmem, size = 0x2000, scoped, tag = 'input window, operand 1, single buffered']
    #allocation5 [shape = 's32[1]{0}', space=sflag, size = 0x4, scoped, tag = 'scoped memory for tpu_custom_call.1']
    %12 = vsyncpa [#allocation3], 0
    %s13 = scalar_lea.sflag [#allocation3], 1
    %14 = vsyncpa %s13, 0
    %15 = vsyncpa [#allocation5], 0
    loop: start=0, step=1, limit=4
    $region2: #{tpu_custom_call.1} parent=1 // loop_pre_header
      _
    $region3: #{tpu_custom_call.1} parent=1 // loop_header
      %s17 = sphi 0, %s21
      %p18 = scmp.ge.s32.totalorder %s17, 4
      %s27 = sphi 0, %s29
      %s30 = sphi 0, %s27
      %s31 = sphi 0, %s30
      %s47 = sphi 0, %s31
      %s51 = sphi 0, %s51
      %s53 = sphi 0, %s51
      %s54 = sphi 0, %s53
      %s68 = sphi 0, %s54
      %s72 = sphi 0, %s72
      %s74 = sphi 0, %s72
      %s75 = sphi 0, %s74
      %s89 = sphi 0, %s75
      %s93 = sphi 0, %s93
      %s95 = sphi 0, %s93
      %s96 = sphi 0, %s95
      %s110 = sphi 0, %s96
      %s114 = sphi 0, %s114
      %s116 = sphi 0, %s114
      %s117 = sphi 0, %s116
      %s131 = sphi 0, %s117
      %s135 = sphi 0, %s135
      %s137 = sphi 0, %s135
      %s138 = sphi 0, %s137
      %s152 = sphi 0, %s138
      %s156 = sphi 0, %s156
      %s158 = sphi 0, %s156
      %s159 = sphi 0, %s158
      %s173 = sphi 0, %s159
      %s179 = sphi 0, %s181
      %s182 = sphi 0, %s179
      %s183 = sphi 0, %s182
      %s199 = sphi 0, %s183
    $region4: #{tpu_custom_call.1} parent=1 // loop_header_branch
      %20 = sbr.rel (%p18) target = $region8
    $region5: #{tpu_custom_call.1} parent=1 // loop_body
      %s22 = ssub.s32 %s17, 1
      %s23 = ssub.s32 %s17, 2
      %s24 = sadd.s32 %s17, 1
      %s25 = ssub.s32 %s17, %s24
      %p26 = scmp.eq.s32.totalorder %s25, 0
      %s28 = sadd.s32 %s27, 1
      %s29 = scalar_select %p26, %s27, %s28
      %p32 = pneg %p26
      %p33 = scmp.eq.s32.totalorder %s17, 1
      %p34 = por %p32, %p33
      %p35 = scmp.ne.s32.totalorder %s27, %s30
      %p36 = scmp.eq.s32.totalorder %s17, 0
      %p37 = por %p35, %p36
      %p38 = scmp.ne.s32.totalorder %s27, %s30
      %p39 = scmp.eq.s32.totalorder %s22, 1
      %p40 = por %p38, %p39
      %p41 = scmp.ne.s32.totalorder %s30, %s31
      %p42 = scmp.eq.s32.totalorder %s22, 0
      %p43 = por %p41, %p42
      %p44 = scmp.ne.s32.totalorder %s30, %s31
      %p45 = scmp.eq.s32.totalorder %s23, 1
      %p46 = por %p44, %p45
      %p48 = scmp.ne.s32.totalorder %s31, %s47
      %p49 = scmp.eq.s32.totalorder %s23, 0
      %p50 = por %p48, %p49
      %s52 = sadd.s32 %s51, 1
      %p55 = scmp.eq.s32.totalorder %s17, 1
      %p56 = scmp.ne.s32.totalorder %s51, %s53
      %p57 = scmp.eq.s32.totalorder %s17, 0
      %p58 = por %p56, %p57
      %p59 = scmp.ne.s32.totalorder %s51, %s53
      %p60 = scmp.eq.s32.totalorder %s22, 1
      %p61 = por %p59, %p60
      %p62 = scmp.ne.s32.totalorder %s53, %s54
      %p63 = scmp.eq.s32.totalorder %s22, 0
      %p64 = por %p62, %p63
      %p65 = scmp.ne.s32.totalorder %s53, %s54
      %p66 = scmp.eq.s32.totalorder %s23, 1
      %p67 = por %p65, %p66
      %p69 = scmp.ne.s32.totalorder %s54, %s68
      %p70 = scmp.eq.s32.totalorder %s23, 0
      %p71 = por %p69, %p70
      %s73 = sadd.s32 %s72, 1
      %p76 = scmp.eq.s32.totalorder %s17, 1
      %p77 = scmp.ne.s32.totalorder %s72, %s74
      %p78 = scmp.eq.s32.totalorder %s17, 0
      %p79 = por %p77, %p78
      %p80 = scmp.ne.s32.totalorder %s72, %s74
      %p81 = scmp.eq.s32.totalorder %s22, 1
      %p82 = por %p80, %p81
      %p83 = scmp.ne.s32.totalorder %s74, %s75
      %p84 = scmp.eq.s32.totalorder %s22, 0
      %p85 = por %p83, %p84
      %p86 = scmp.ne.s32.totalorder %s74, %s75
      %p87 = scmp.eq.s32.totalorder %s23, 1
      %p88 = por %p86, %p87
      %p90 = scmp.ne.s32.totalorder %s75, %s89
      %p91 = scmp.eq.s32.totalorder %s23, 0
      %p92 = por %p90, %p91
      %s94 = sadd.s32 %s93, 1
      %p97 = scmp.eq.s32.totalorder %s17, 1
      %p98 = scmp.ne.s32.totalorder %s93, %s95
      %p99 = scmp.eq.s32.totalorder %s17, 0
      %p100 = por %p98, %p99
      %p101 = scmp.ne.s32.totalorder %s93, %s95
      %p102 = scmp.eq.s32.totalorder %s22, 1
      %p103 = por %p101, %p102
      %p104 = scmp.ne.s32.totalorder %s95, %s96
      %p105 = scmp.eq.s32.totalorder %s22, 0
      %p106 = por %p104, %p105
      %p107 = scmp.ne.s32.totalorder %s95, %s96
      %p108 = scmp.eq.s32.totalorder %s23, 1
      %p109 = por %p107, %p108
      %p111 = scmp.ne.s32.totalorder %s96, %s110
      %p112 = scmp.eq.s32.totalorder %s23, 0
      %p113 = por %p111, %p112
      %s115 = sadd.s32 %s114, 1
      %p118 = scmp.eq.s32.totalorder %s17, 1
      %p119 = scmp.ne.s32.totalorder %s114, %s116
      %p120 = scmp.eq.s32.totalorder %s17, 0
      %p121 = por %p119, %p120
      %p122 = scmp.ne.s32.totalorder %s114, %s116
      %p123 = scmp.eq.s32.totalorder %s22, 1
      %p124 = por %p122, %p123
      %p125 = scmp.ne.s32.totalorder %s116, %s117
      %p126 = scmp.eq.s32.totalorder %s22, 0
      %p127 = por %p125, %p126
      %p128 = scmp.ne.s32.totalorder %s116, %s117
      %p129 = scmp.eq.s32.totalorder %s23, 1
      %p130 = por %p128, %p129
      %p132 = scmp.ne.s32.totalorder %s117, %s131
      %p133 = scmp.eq.s32.totalorder %s23, 0
      %p134 = por %p132, %p133
      %s136 = sadd.s32 %s135, 1
      %p139 = scmp.eq.s32.totalorder %s17, 1
      %p140 = scmp.ne.s32.totalorder %s135, %s137
      %p141 = scmp.eq.s32.totalorder %s17, 0
      %p142 = por %p140, %p141
      %p143 = scmp.ne.s32.totalorder %s135, %s137
      %p144 = scmp.eq.s32.totalorder %s22, 1
      %p145 = por %p143, %p144
      %p146 = scmp.ne.s32.totalorder %s137, %s138
      %p147 = scmp.eq.s32.totalorder %s22, 0
      %p148 = por %p146, %p147
      %p149 = scmp.ne.s32.totalorder %s137, %s138
      %p150 = scmp.eq.s32.totalorder %s23, 1
      %p151 = por %p149, %p150
      %p153 = scmp.ne.s32.totalorder %s138, %s152
      %p154 = scmp.eq.s32.totalorder %s23, 0
      %p155 = por %p153, %p154
      %s157 = sadd.s32 %s156, 1
      %p160 = scmp.eq.s32.totalorder %s17, 1
      %p161 = scmp.ne.s32.totalorder %s156, %s158
      %p162 = scmp.eq.s32.totalorder %s17, 0
      %p163 = por %p161, %p162
      %p164 = scmp.ne.s32.totalorder %s156, %s158
      %p165 = scmp.eq.s32.totalorder %s22, 1
      %p166 = por %p164, %p165
      %p167 = scmp.ne.s32.totalorder %s158, %s159
      %p168 = scmp.eq.s32.totalorder %s22, 0
      %p169 = por %p167, %p168
      %p170 = scmp.ne.s32.totalorder %s158, %s159
      %p171 = scmp.eq.s32.totalorder %s23, 1
      %p172 = por %p170, %p171
      %p174 = scmp.ne.s32.totalorder %s159, %s173
      %p175 = scmp.eq.s32.totalorder %s23, 0
      %p176 = por %p174, %p175
      %s177 = ssub.s32 %s17, %s24
      %p178 = scmp.eq.s32.totalorder %s177, 0
      %s180 = sadd.s32 %s179, 1
      %s181 = scalar_select %p178, %s179, %s180
      %p184 = pneg %p178
      %p185 = scmp.eq.s32.totalorder %s17, 1
      %p186 = por %p184, %p185
      %p187 = scmp.ne.s32.totalorder %s179, %s182
      %p188 = scmp.eq.s32.totalorder %s17, 0
      %p189 = por %p187, %p188
      %p190 = scmp.ne.s32.totalorder %s179, %s182
      %p191 = scmp.eq.s32.totalorder %s22, 1
      %p192 = por %p190, %p191
      %p193 = scmp.ne.s32.totalorder %s182, %s183
      %p194 = scmp.eq.s32.totalorder %s22, 0
      %p195 = por %p193, %p194
      %p196 = scmp.ne.s32.totalorder %s182, %s183
      %p197 = scmp.eq.s32.totalorder %s23, 1
      %p198 = por %p196, %p197
      %p200 = scmp.ne.s32.totalorder %s183, %s199
      %p201 = scmp.eq.s32.totalorder %s23, 0
      %p202 = por %p200, %p201
      %p203 = scmp.le.s32.totalorder 1, %s17
      %p204 = scmp.lt.s32.totalorder %s17, 3
      %p205 = pnand %p203, %p204
      %p206 = pneg %p205
      // Predicated region
      $region9: #{tpu_custom_call.1} parent=5 // pred_check
        _
      $region10: #{tpu_custom_call.1} parent=5 // pred_check_branch
        %208 = sbr.rel (%p205) target = $region12
      $region11: #{tpu_custom_call.1} parent=5 // pred_region
        %s209 = ssub.s32 %s17, 1
        // Predicated region
        $region13: #{tpu_custom_call.1} parent=11 // pred_check
          %p210 = pneg %p64
        $region14: #{tpu_custom_call.1} parent=11 // pred_check_branch
          %212 = sbr.rel (%p210) target = $region16
        $region15: #{tpu_custom_call.1} parent=11 // pred_region
          %214 = vsyncadd [#allocation5], 0
          %s215 = sshll.u32 %s1, 4
          %s216 = int_to_ptr.hbm [resolvable:$true] %s215
          %s217 = sshll.u32 [#allocation4], 4
          %s218 = int_to_ptr.vmem [resolvable:$true] %s217
          %223 = dma.hbm_to_vmem [thread:$0]  %s216, 256, %s218, [#allocation5], 64, 64, 4
        $region16: #{tpu_custom_call.1} parent=11 // pred_fallthru
          _
        // Predicated region
        $region17: #{tpu_custom_call.1} parent=11 // pred_check
          %p224 = pneg %p85
        $region18: #{tpu_custom_call.1} parent=11 // pred_check_branch
          %226 = sbr.rel (%p224) target = $region20
        $region19: #{tpu_custom_call.1} parent=11 // pred_region
          _
        $region20: #{tpu_custom_call.1} parent=11 // pred_fallthru
          _
        // Predicated region
        $region21: #{tpu_custom_call.1} parent=11 // pred_check
          %p227 = pneg %p106
        $region22: #{tpu_custom_call.1} parent=11 // pred_check_branch
          %229 = sbr.rel (%p227) target = $region24
        $region23: #{tpu_custom_call.1} parent=11 // pred_region
          _
        $region24: #{tpu_custom_call.1} parent=11 // pred_fallthru
          _
        // Predicated region
        $region25: #{tpu_custom_call.1} parent=11 // pred_check
          %p230 = pneg %p127
        $region26: #{tpu_custom_call.1} parent=11 // pred_check_branch
          %232 = sbr.rel (%p230) target = $region28
        $region27: #{tpu_custom_call.1} parent=11 // pred_region
          _
        $region28: #{tpu_custom_call.1} parent=11 // pred_fallthru
          _
        // Predicated region
        $region29: #{tpu_custom_call.1} parent=11 // pred_check
          %p233 = pneg %p148
        $region30: #{tpu_custom_call.1} parent=11 // pred_check_branch
          %235 = sbr.rel (%p233) target = $region32
        $region31: #{tpu_custom_call.1} parent=11 // pred_region
          _
        $region32: #{tpu_custom_call.1} parent=11 // pred_fallthru
          _
        // Predicated region
        $region33: #{tpu_custom_call.1} parent=11 // pred_check
          %p236 = pneg %p169
        $region34: #{tpu_custom_call.1} parent=11 // pred_check_branch
          %238 = sbr.rel (%p236) target = $region36
        $region35: #{tpu_custom_call.1} parent=11 // pred_region
          _
        $region36: #{tpu_custom_call.1} parent=11 // pred_fallthru
          _
      $region12: #{tpu_custom_call.1} parent=5 // pred_fallthru
        _
      %p239 = scmp.lt.s32.totalorder %s17, 2
      // Predicated region
      $region37: #{tpu_custom_call.1} parent=5 // pred_check
        %p240 = pneg %p239
      $region38: #{tpu_custom_call.1} parent=5 // pred_check_branch
        %242 = sbr.rel (%p240) target = $region40
      $region39: #{tpu_custom_call.1} parent=5 // pred_region
        // Predicated region
        $region41: #{tpu_custom_call.1} parent=39 // pred_check
          %p243 = pneg %p37
        $region42: #{tpu_custom_call.1} parent=39 // pred_check_branch
          %245 = sbr.rel (%p243) target = $region44
        $region43: #{tpu_custom_call.1} parent=39 // pred_region
          %s246 = sand.u32 %s27, 1
          %s247 = scalar_lea.sflag [#allocation3], %s246
          %s248 = sand.u32 %s27, 1
          %s249 = smul.addr %s248, 8
          %s250 = scalar_lea.vmem [#allocation2], %s249
          %252 = vsyncadd %s247, 0
          %s253 = smul.addr %s17, 8
          %s254 = scalar_lea.hbm %s0, %s253
          %s256 = sshll.u32 %s254, 4
          %s257 = int_to_ptr.hbm [resolvable:$true] %s256
          %s258 = sshll.u32 %s250, 4
          %s259 = int_to_ptr.vmem [resolvable:$true] %s258
          %261 = dma.hbm_to_vmem [thread:$0]  %s257, 128, %s259, %s247
        $region44: #{tpu_custom_call.1} parent=39 // pred_fallthru
          _
      $region40: #{tpu_custom_call.1} parent=5 // pred_fallthru
        _
      %p262 = scmp.le.s32.totalorder 1, %s17
      %p263 = scmp.lt.s32.totalorder %s17, 3
      %p264 = pnand %p262, %p263
      %p265 = pneg %p264
      // Predicated region
      $region45: #{tpu_custom_call.1} parent=5 // pred_check
        _
      $region46: #{tpu_custom_call.1} parent=5 // pred_check_branch
        %267 = sbr.rel (%p264) target = $region48
      $region47: #{tpu_custom_call.1} parent=5 // pred_region
        %s268 = ssub.s32 %s17, 1
        %s269 = sand.u32 %s30, 1
        %s270 = scalar_lea.sflag [#allocation3], %s269
        %s271 = sand.u32 %s30, 1
        %s272 = smul.addr %s271, 8
        %s273 = scalar_lea.vmem [#allocation2], %s272
        // Predicated region
        $region49: #{tpu_custom_call.1} parent=47 // pred_check
          %p274 = pneg %p43
        $region50: #{tpu_custom_call.1} parent=47 // pred_check_branch
          %276 = sbr.rel (%p274) target = $region52
        $region51: #{tpu_custom_call.1} parent=47 // pred_region
          %278 = dma.done %s270, 128
        $region52: #{tpu_custom_call.1} parent=47 // pred_fallthru
          _
        // Predicated region
        $region53: #{tpu_custom_call.1} parent=47 // pred_check
          %p279 = pneg %p64
        $region54: #{tpu_custom_call.1} parent=47 // pred_check_branch
          %281 = sbr.rel (%p279) target = $region56
        $region55: #{tpu_custom_call.1} parent=47 // pred_region
          %283 = dma.done [#allocation5], 256
        $region56: #{tpu_custom_call.1} parent=47 // pred_fallthru
          _
        %s284 = sand.u32 %s30, 1
        %s285 = scalar_lea.sflag [#allocation3], %s284
        %s286 = sand.u32 %s30, 1
        %s287 = smul.addr %s286, 8
        %s288 = scalar_lea.vmem [#allocation2], %s287
        %p289 = pneg %p43
        %p290 = pneg %p40
        %p291 = pneg %p64
        %p292 = pneg %p61
        %p293 = pneg %p85
        %p294 = pneg %p82
        %p295 = pneg %p106
        %p296 = pneg %p103
        %p297 = pneg %p127
        %p298 = pneg %p124
        %p299 = pneg %p148
        %p300 = pneg %p145
        %p301 = pneg %p169
        %p302 = pneg %p166
        %p303 = pneg %p195
        %p304 = pneg %p192
        %p305 = scmp.lt.s32.totalorder %s22, 1
        %s306 = scalar_select %p305, %s22, 1
        %s307 = smul.addr %s306, 8
        %s308 = scalar_lea.vmem %s7, %s307
        %p309 = scmp.lt.s32.totalorder %s22, 1
        %s310 = scalar_select %p309, %s22, 1
        %s311 = smul.addr %s310, 8
        %s312 = scalar_lea.vmem %s7, %s311
        %v314 = vld [vmem:[%s273] sm:$0xff]
        %v315 = vpack.c.bf16 %v314, %v314
        %v316 = vld [vmem:[#allocation4] sm:$0xf]
        %v317 = vld [vmem:[#allocation4 + $0x4] sm:$0xf]
        %v318 = vld [vmem:[#allocation4 + $0x8] sm:$0xf]
        %v319 = vld [vmem:[#allocation4 + $0xc] sm:$0xf]
        %v320 = vld [vmem:[%s2] sm:$0x1]
        %v322 = vperm.slane %v320, 0
        %v328 = vunpack.c.l.b16 %v316
        %v329 = vunpack.c.l.b16 %v317
        %v330 = vunpack.c.l.b16 %v318
        %v331 = vunpack.c.l.b16 %v319
        %v332 = vpack.c.b16 %v329, %v328
        %v333 = vpack.c.b16 %v331, %v330
        %vm336 = vcmask 261120
        %v338 = vsel %vm336, %v315, 0
        %340 = vmatpush.bf16.msra.mxu0 0
        %341 = vmatpush.bf16.msra.mxu0 0
        %342 = vmatpush.bf16.msra.mxu0 0
        %343 = vmatpush.bf16.msra.mxu0 0
        %344 = vmatpush.bf16.msra.mxu0 0
        %345 = vmatpush.bf16.msra.mxu0 0
        %346 = vmatpush.bf16.msra.mxu0 %v333
        %347 = vmatpush.bf16.msra.mxu0 %v332
        %348 = vmatmul.bf16.gmra.mxu0 %v338
        %v349 = vpop.f32.mrf.mxu0
        %v350 = vadd.f32 %v322, %v349
        %v351 = vpop.f32.mrf.mxu0
        %352 = vdwg.mxu0
        %v353 = vpack.c.bf16 %v350, %v350
        %v354 = vunpack.c.l.bf16 %v353
        %vm355 = vcmp.ge.f32.partialorder %v354, 0.0
        %v356 = vmul.f32 %v354, 0.010009766
        %v357 = vpack.c.bf16 %v356, %v356
        %vm358 = vmpackc.low %vm355, %vm355
        %v359 = vsel %vm358, %v353, %v357
        %v360 = vld [vmem:[%s3] sm:$0xf]
        %v361 = vld [vmem:[%s3 + $0x4] sm:$0xf]
        %v362 = vld [vmem:[%s3 + $0x8] sm:$0xf]
        %v363 = vld [vmem:[%s3 + $0xc] sm:$0xf]
        %v364 = vld [vmem:[%s3 + $0x10] sm:$0xf]
        %v365 = vld [vmem:[%s3 + $0x14] sm:$0xf]
        %v366 = vld [vmem:[%s3 + $0x18] sm:$0xf]
        %v367 = vld [vmem:[%s3 + $0x1c] sm:$0xf]
        %v368 = vld [vmem:[%s3 + $0x20] sm:$0xf]
        %v369 = vld [vmem:[%s3 + $0x24] sm:$0xf]
        %v370 = vld [vmem:[%s3 + $0x28] sm:$0xf]
        %v371 = vld [vmem:[%s3 + $0x2c] sm:$0xf]
        %v372 = vld [vmem:[%s3 + $0x30] sm:$0xf]
        %v373 = vld [vmem:[%s3 + $0x34] sm:$0xf]
        %v374 = vld [vmem:[%s3 + $0x38] sm:$0xf]
        %v375 = vld [vmem:[%s3 + $0x3c] sm:$0xf]
        %v376 = vld [vmem:[%s4] sm:$0x1]
        %v378 = vperm.slane %v376, 0
        %v396 = vunpack.c.l.b16 %v360
        %v397 = vunpack.c.l.b16 %v361
        %v398 = vunpack.c.l.b16 %v362
        %v399 = vunpack.c.l.b16 %v363
        %v400 = vunpack.c.l.b16 %v364
        %v401 = vunpack.c.l.b16 %v365
        %v402 = vunpack.c.l.b16 %v366
        %v403 = vunpack.c.l.b16 %v367
        %v404 = vunpack.c.l.b16 %v368
        %v405 = vunpack.c.l.b16 %v369
        %v406 = vunpack.c.l.b16 %v370
        %v407 = vunpack.c.l.b16 %v371
        %v408 = vunpack.c.l.b16 %v372
        %v409 = vunpack.c.l.b16 %v373
        %v410 = vunpack.c.l.b16 %v374
        %v411 = vunpack.c.l.b16 %v375
        %v412 = vpack.c.b16 %v397, %v396
        %v413 = vpack.c.b16 %v399, %v398
        %v414 = vpack.c.b16 %v401, %v400
        %v415 = vpack.c.b16 %v403, %v402
        %v416 = vpack.c.b16 %v405, %v404
        %v417 = vpack.c.b16 %v407, %v406
        %v418 = vpack.c.b16 %v409, %v408
        %v419 = vpack.c.b16 %v411, %v410
        %428 = vmatpush.bf16.msra.mxu0 %v419
        %429 = vmatpush.bf16.msra.mxu0 %v418
        %430 = vmatpush.bf16.msra.mxu0 %v417
        %431 = vmatpush.bf16.msra.mxu0 %v416
        %432 = vmatpush.bf16.msra.mxu0 %v415
        %433 = vmatpush.bf16.msra.mxu0 %v414
        %434 = vmatpush.bf16.msra.mxu0 %v413
        %435 = vmatpush.bf16.msra.mxu0 %v412
        %436 = vmatmul.bf16.gmra.mxu0 %v359
        %v437 = vpop.f32.mrf.mxu0
        %v438 = vadd.f32 %v378, %v437
        %v439 = vpop.f32.mrf.mxu0
        %440 = vdwg.mxu0
        %v441 = vpack.c.bf16 %v438, %v438
        %v442 = vunpack.c.l.bf16 %v441
        %vm443 = vcmp.ge.f32.partialorder %v442, 0.0
        %v444 = vmul.f32 %v442, 0.010009766
        %v445 = vpack.c.bf16 %v444, %v444
        %vm446 = vmpackc.low %vm443, %vm443
        %v447 = vsel %vm446, %v441, %v445
        %v448 = vld [vmem:[%s5] sm:$0xf]
        %v449 = vld [vmem:[%s5 + $0x4] sm:$0xf]
        %v450 = vld [vmem:[%s5 + $0x8] sm:$0xf]
        %v451 = vld [vmem:[%s5 + $0xc] sm:$0xf]
        %v452 = vld [vmem:[%s5 + $0x10] sm:$0xf]
        %v453 = vld [vmem:[%s5 + $0x14] sm:$0xf]
        %v454 = vld [vmem:[%s5 + $0x18] sm:$0xf]
        %v455 = vld [vmem:[%s5 + $0x1c] sm:$0xf]
        %v456 = vld [vmem:[%s5 + $0x20] sm:$0xf]
        %v457 = vld [vmem:[%s5 + $0x24] sm:$0xf]
        %v458 = vld [vmem:[%s5 + $0x28] sm:$0xf]
        %v459 = vld [vmem:[%s5 + $0x2c] sm:$0xf]
        %v460 = vld [vmem:[%s5 + $0x30] sm:$0xf]
        %v461 = vld [vmem:[%s5 + $0x34] sm:$0xf]
        %v462 = vld [vmem:[%s5 + $0x38] sm:$0xf]
        %v463 = vld [vmem:[%s5 + $0x3c] sm:$0xf]
        %v464 = vld [vmem:[%s6] sm:$0x1]
        %v466 = vperm.slane %v464, 0
        %v484 = vunpack.c.l.b16 %v448
        %v485 = vunpack.c.l.b16 %v449
        %v486 = vunpack.c.l.b16 %v450
        %v487 = vunpack.c.l.b16 %v451
        %v488 = vunpack.c.l.b16 %v452
        %v489 = vunpack.c.l.b16 %v453
        %v490 = vunpack.c.l.b16 %v454
        %v491 = vunpack.c.l.b16 %v455
        %v492 = vunpack.c.l.b16 %v456
        %v493 = vunpack.c.l.b16 %v457
        %v494 = vunpack.c.l.b16 %v458
        %v495 = vunpack.c.l.b16 %v459
        %v496 = vunpack.c.l.b16 %v460
        %v497 = vunpack.c.l.b16 %v461
        %v498 = vunpack.c.l.b16 %v462
        %v499 = vunpack.c.l.b16 %v463
        %v500 = vpack.c.b16 %v485, %v484
        %v501 = vpack.c.b16 %v487, %v486
        %v502 = vpack.c.b16 %v489, %v488
        %v503 = vpack.c.b16 %v491, %v490
        %v504 = vpack.c.b16 %v493, %v492
        %v505 = vpack.c.b16 %v495, %v494
        %v506 = vpack.c.b16 %v497, %v496
        %v507 = vpack.c.b16 %v499, %v498
        %516 = vmatpush.bf16.msra.mxu0 %v507
        %517 = vmatpush.bf16.msra.mxu0 %v506
        %518 = vmatpush.bf16.msra.mxu0 %v505
        %519 = vmatpush.bf16.msra.mxu0 %v504
        %520 = vmatpush.bf16.msra.mxu0 %v503
        %521 = vmatpush.bf16.msra.mxu0 %v502
        %522 = vmatpush.bf16.msra.mxu0 %v501
        %523 = vmatpush.bf16.msra.mxu0 %v500
        %524 = vmatmul.bf16.gmra.mxu0 %v447
        %v525 = vpop.f32.mrf.mxu0
        %v526 = vadd.f32 %v466, %v525
        %v527 = vpop.f32.mrf.mxu0
        %528 = vdwg.mxu0
        %vm529 = vcmask 31744
        %530 = vst.msk [vmem:[%s312] sm:$0xff] %vm529, %v526
        %p531 = scmp.lt.s32.totalorder %s22, 1
        %s532 = scalar_select %p531, %s22, 1
        %s533 = smul.addr %s532, 8
        %s534 = scalar_lea.vmem %s7, %s533
        // Predicated region
        $region57: #{tpu_custom_call.1} parent=47 // pred_check
          %p535 = pneg %p192
        $region58: #{tpu_custom_call.1} parent=47 // pred_check_branch
          %537 = sbr.rel (%p535) target = $region60
        $region59: #{tpu_custom_call.1} parent=47 // pred_region
          _
        $region60: #{tpu_custom_call.1} parent=47 // pred_fallthru
          _
      $region48: #{tpu_custom_call.1} parent=5 // pred_fallthru
        _
      %p538 = scmp.le.s32.totalorder 2, %s17
      // Predicated region
      $region61: #{tpu_custom_call.1} parent=5 // pred_check
        %p539 = pneg %p538
      $region62: #{tpu_custom_call.1} parent=5 // pred_check_branch
        %541 = sbr.rel (%p539) target = $region64
      $region63: #{tpu_custom_call.1} parent=5 // pred_region
        %s542 = ssub.s32 %s17, 2
        // Predicated region
        $region65: #{tpu_custom_call.1} parent=63 // pred_check
          %p543 = pneg %p198
        $region66: #{tpu_custom_call.1} parent=63 // pred_check_branch
          %545 = sbr.rel (%p543) target = $region68
        $region67: #{tpu_custom_call.1} parent=63 // pred_region
          %p546 = scmp.lt.s32.totalorder %s23, 1
          %s547 = scalar_select %p546, %s23, 1
          %s548 = smul.addr %s547, 8
          %s549 = scalar_lea.vmem %s7, %s548
        $region68: #{tpu_custom_call.1} parent=63 // pred_fallthru
          _
      $region64: #{tpu_custom_call.1} parent=5 // pred_fallthru
        _
    $region6: #{tpu_custom_call.1} parent=1 // loop_footer
      %s21 = sadd.s32 1, %s17
    $region7: #{tpu_custom_call.1} parent=1 // loop_footer_branch
      %16 = sbr.rel target = $region3
    $region8: #{tpu_custom_call.1} parent=1 // loop_exit
      _
    %550 = vsyncpa [#allocation3], 1
    %s551 = scalar_lea.sflag [#allocation3], 1
    %552 = vsyncpa %s551, 1
    %553 = vsyncpa [#allocation5], 1

</llo_original>
